<compile_context>
chip_gen: v6e
topology: v6e:2x2x1
jax: 0.10.0
libtpu: 0.0.40
codegen_flags: <defaults>
</compile_context>

<pallas_src>
import jax
import jax.numpy as jnp
import numpy as np
from jax import lax
from jax.experimental import pallas as pl
from jax.experimental.pallas import tpu as pltpu

EPS = 1e-5
COMPUTE_DTYPE = jnp.bfloat16          # MXU-native operand dtype; accumulation stays f32
VMEM_LIMIT_BYTES = 48 * 1024 * 1024   # safe on v7x (64 MiB phys); v5e/v6e have 128 MiB


# ----------------------------- BN statistics kernel -------------------------

def _stats_kernel(x_ref, o_ref):
    """Per-tile partial BN statistics: o_ref[0] = [mean_tile; M2_tile], shape (2, C).

    Tiles are independent (grid axis 'parallel'); the tiny Chan combine across tiles
    happens in the JAX wrapper, so no resident accumulator / pl.program_id is needed.
    """
    x = x_ref[...].astype(jnp.float32)                       # (tm, W, C)
    tm, w, c = x.shape
    xf = x.reshape(tm * w, c)
    mu = jnp.mean(xf, axis=0, keepdims=True)                 # (1, C)
    m2 = jnp.sum((xf - mu) ** 2, axis=0, keepdims=True)      # (1, C)
    o_ref[0, 0:1, :] = mu
    o_ref[0, 1:2, :] = m2


def _combine_stats(partials, count_per_group):
    """Chan-combine equal-sized per-group (mean, M2) partials -> (mean, biased var)."""
    means = partials[:, 0, :]                                # (G, C)
    m2s = partials[:, 1, :]
    g = partials.shape[0]
    mean = jnp.mean(means, axis=0)
    m2 = jnp.sum(m2s, axis=0) + count_per_group * jnp.sum((means - mean) ** 2, axis=0)
    var = m2 / (g * count_per_group)
    return mean, var


def channel_stats(x, target_block_bytes=4 * 1024 * 1024):
    """Per-channel (mean, biased var) over (N, H, W) of an NHWC array.

    The row tile is picked by a byte budget (not a fixed row count); tiles emit partial
    (mean, M2) blocks in parallel, combined stably in the wrapper.
    """
    n, h, w, c = x.shape
    m = n * h
    x2 = x.reshape(m, w, c)                                  # contiguous reshape, free
    row_bytes = max(1, w * c * x.dtype.itemsize)
    tm = max(1, min(m, target_block_bytes // row_bytes))
    while m % tm:
        tm -= 1
    num_tiles = m // tm
    parts = pl.pallas_call(
        _stats_kernel,
        out_shape=jax.ShapeDtypeStruct((num_tiles, 2, c), jnp.float32),
        grid=(num_tiles,),
        in_specs=[pl.BlockSpec((tm, w, c), lambda i: (i, 0, 0))],
        out_specs=pl.BlockSpec((1, 2, c), lambda i: (i, 0, 0)),
        compiler_params=pltpu.CompilerParams(
            dimension_semantics=("parallel",),
            vmem_limit_bytes=VMEM_LIMIT_BYTES),
    )(x2)
    return _combine_stats(parts, float(tm * w))


# ----------------------------- fused BN+ReLU+conv3x3 kernel ------------------

def _make_fused_conv_kernel(s, h, w, cin, cout, cout_sc, fuse_residual, emit_stats):
    """BN affine + ReLU + 3x3/pad-1/stride-s conv.

    The 1x1 shortcut (when present) lives in extra output columns of the packed weight
    (nonzero only at the kh=1/kw=1 tap), so a single accumulator produces both results.
    Optionally adds a residual and/or emits per-image partial BN stats of the conv output
    (pre-residual) for the *next* BatchNorm.
    """
    ho = (h - 1) // s + 1
    wo = (w - 1) // s + 1
    ct = cout + cout_sc

    def kernel(*refs):
        refs = list(refs)
        x_ref = refs.pop(0)
        ss_ref = refs.pop(0)
        w_ref = refs.pop(0)
        res_ref = refs.pop(0) if fuse_residual else None
        o_ref = refs.pop(0)
        sc_ref = refs.pop(0) if cout_sc > 0 else None
        st_ref = refs.pop(0) if emit_stats else None
        pad_ref = refs.pop(0)                                # VMEM (H+2, W+2, Cin) scratch

        # ---- BN affine + ReLU on this image (stats precomputed & folded) ----
        x = x_ref[0].astype(jnp.float32)                     # (H, W, Cin)
        scale = ss_ref[0:1, :].reshape(1, 1, cin)
        shift = ss_ref[1:2, :].reshape(1, 1, cin)
        y = jnp.maximum(x * scale + shift, 0.0)

        # ---- pad=1 halo in VMEM: zero only the 1-wide border (interior overwritten) ----
        zrow = jnp.zeros((1, w + 2, cin), pad_ref.dtype)
        zcol = jnp.zeros((h + 2, 1, cin), pad_ref.dtype)
        pad_ref[0:1, :, :] = zrow
        pad_ref[h + 1:h + 2, :, :] = zrow
        pad_ref[:, 0:1, :] = zcol
        pad_ref[:, w + 1:w + 2, :] = zcol
        pad_ref[1:h + 1, 1:w + 1, :] = y.astype(pad_ref.dtype)

        # ---- 3x3 conv; stride applied via exact strided loads (no over-read / OOB) ----
        # For Cin < 128, keep per-(kh,kw) matmuls (no lane-concat of skinny taps);
        # pack the 3 kw taps into K=3*Cin only when Cin is a lane multiple.
        pack_kw = (cin % 128 == 0)
        acc = jnp.zeros((ho * wo, ct), jnp.float32)
        for kh in range(3):
            taps = []
            for kw in range(3):
                if s == 1:
                    tap = pad_ref[kh:kh + ho, kw:kw + wo, :]
                else:
                    tap = pad_ref[pl.ds(kh, ho, s), pl.ds(kw, wo, s), :]
                tap = tap.reshape(ho * wo, cin).astype(COMPUTE_DTYPE)   # bf16 MXU operand
                if pack_kw:
                    taps.append(tap)
                else:
                    acc = acc + jnp.dot(tap, w_ref[kh, kw * cin:(kw + 1) * cin, :],
                                        preferred_element_type=jnp.float32)
            if pack_kw:
                patch = jnp.concatenate(taps, axis=-1)       # (ho*wo, 3*Cin)
                acc = acc + jnp.dot(patch, w_ref[kh],
                                    preferred_element_type=jnp.float32)

        out = acc[:, :cout]                                  # f32 conv result

        if emit_stats:
            # Per-image partial stats of the conv output (pre-residual) for BN2;
            # combined across images in JAX -> saves a full HBM re-read of out1.
            mu = jnp.mean(out, axis=0, keepdims=True)
            m2 = jnp.sum((out - mu) ** 2, axis=0, keepdims=True)
            st_ref[0, 0:1, :] = mu
            st_ref[0, 1:2, :] = m2

        out3 = out.reshape(ho, wo, cout)
        if fuse_residual:
            out3 = out3 + res_ref[0].astype(jnp.float32)
        o_ref[0] = out3.astype(o_ref.dtype)

        if cout_sc > 0:
            sc_ref[0] = acc[:, cout:].reshape(ho, wo, cout_sc).astype(sc_ref.dtype)

    return kernel


def fused_conv(x, scale_shift, w_packed, stride, *, cout, residual=None, emit_stats=False):
    """Grid over batch (one image per step), pipelined + megacore-parallel."""
    n, h, w, cin = x.shape
    ct = w_packed.shape[-1]
    cout_sc = ct - cout
    ho = (h - 1) // stride + 1
    wo = (w - 1) // stride + 1

    kernel = _make_fused_conv_kernel(stride, h, w, cin, cout, cout_sc,
                                     residual is not None, emit_stats)

    in_specs = [
        pl.BlockSpec((1, h, w, cin), lambda i: (i, 0, 0, 0)),
        pl.BlockSpec((2, cin), lambda i: (0, 0)),
        pl.BlockSpec((3, 3 * cin, ct), lambda i: (0, 0, 0)),
    ]
    args = [x, scale_shift, w_packed]
    if residual is not None:
        in_specs.append(pl.BlockSpec((1, ho, wo, cout), lambda i: (i, 0, 0, 0)))
        args.append(residual)

    out_shape = [jax.ShapeDtypeStruct((n, ho, wo, cout), x.dtype)]
    out_specs = [pl.BlockSpec((1, ho, wo, cout), lambda i: (i, 0, 0, 0))]
    if cout_sc > 0:
        out_shape.append(jax.ShapeDtypeStruct((n, ho, wo, cout_sc), x.dtype))
        out_specs.append(pl.BlockSpec((1, ho, wo, cout_sc), lambda i: (i, 0, 0, 0)))
    if emit_stats:
        out_shape.append(jax.ShapeDtypeStruct((n, 2, cout), jnp.float32))
        out_specs.append(pl.BlockSpec((1, 2, cout), lambda i: (i, 0, 0)))

    outs = pl.pallas_call(
        kernel,
        out_shape=tuple(out_shape),
        grid=(n,),
        in_specs=in_specs,
        out_specs=tuple(out_specs),
        scratch_shapes=[pltpu.VMEM((h + 2, w + 2, cin), jnp.float32)],
        compiler_params=pltpu.CompilerParams(
            dimension_semantics=("parallel",),
            vmem_limit_bytes=VMEM_LIMIT_BYTES),
    )(*args)
    if not isinstance(outs, (list, tuple)):
        outs = (outs,)
    return tuple(outs)


# ----------------------------- parameters / weight packing -------------------

def _pack_w3x3(w_oihw, dtype=COMPUTE_DTYPE):
    """(O, I, 3, 3) -> (3, 3*I, O): per-kh, the 3 kw taps packed along K (kw-major)."""
    o, i = w_oihw.shape[:2]
    w_hwio = jnp.transpose(w_oihw, (2, 3, 1, 0))             # (3, 3, I, O)
    return w_hwio.reshape(3, 3 * i, o).astype(dtype)


def _fold_shortcut(w3_packed, wsc_oi11, dtype=COMPUTE_DTYPE):
    """Fold the strided 1x1 shortcut into extra output columns of the packed weight.

    The 1x1 conv only sees the center tap (kh=1, kw=1) of relu(bn1(x)), so its weights
    live at rows [I:2I] of the kh=1 slice (zero elsewhere); one matmul then produces the
    conv and the shortcut together (better MXU N-fill, one fewer skinny matmul).
    """
    o_sc, i = wsc_oi11.shape[:2]
    wsc = jnp.transpose(wsc_oi11[:, :, 0, 0])                # (I, O_sc)
    block = jnp.zeros((3, 3 * i, o_sc), dtype)
    block = block.at[1, i:2 * i, :].set(wsc.astype(dtype))
    return jnp.concatenate([w3_packed, block], axis=-1)


def init_params(key, in_planes, planes, stride):
    """Deterministic (PRNGKey-derived) parameters matching PyTorch shapes."""
    ks = jax.random.split(key, 7)
    p = {
        "bn1_g": 1.0 + 0.1 * jax.random.normal(ks[0], (in_planes,), jnp.float32),
        "bn1_b": 0.1 * jax.random.normal(ks[1], (in_planes,), jnp.float32),
        "conv1_w": jax.random.normal(ks[2], (planes, in_planes, 3, 3), jnp.float32)
                   * np.sqrt(2.0 / (in_planes * 9)),
        "bn2_g": 1.0 + 0.1 * jax.random.normal(ks[3], (planes,), jnp.float32),
        "bn2_b": 0.1 * jax.random.normal(ks[4], (planes,), jnp.float32),
        "conv2_w": jax.random.normal(ks[5], (planes, planes, 3, 3), jnp.float32)
                   * np.sqrt(2.0 / (planes * 9)),
    }
    if stride != 1 or in_planes != planes:       # expansion == 1
        p["shortcut_w"] = (jax.random.normal(ks[6], (planes, in_planes, 1, 1), jnp.float32)
                           * np.sqrt(2.0 / in_planes))
    return p


# ----------------------------- forward ---------------------------------------

def preact_block_forward(x_nchw, params, stride=1):
    """Pallas implementation of PreActBlock.forward (NCHW in / NCHW out, training-mode BN)."""
    x = jnp.transpose(x_nchw, (0, 2, 3, 1)).astype(jnp.float32)     # NCHW -> NHWC
    n, h, w, cin = x.shape
    planes = params["conv1_w"].shape[0]
    ho = (h - 1) // stride + 1
    wo = (w - 1) // stride + 1

    # BN1 batch stats (parallel per-tile partials + Chan combine) -> folded affine.
    mean1, var1 = channel_stats(x)
    scale1 = params["bn1_g"] * lax.rsqrt(var1 + EPS)
    ss1 = jnp.stack([scale1, params["bn1_b"] - mean1 * scale1])     # (2, Cin)

    w1 = _pack_w3x3(params["conv1_w"])
    has_sc = "shortcut_w" in params
    if has_sc:
        w1 = _fold_shortcut(w1, params["shortcut_w"])

    outs = fused_conv(x, ss1, w1, stride, cout=planes, emit_stats=True)
    if has_sc:
        out1, shortcut, st1 = outs
    else:
        out1, st1 = outs
        shortcut = x                                                 # identity path

    # BN2 stats came fused out of conv1's epilogue -> combine + folded affine.
    mean2, var2 = _combine_stats(st1, float(ho * wo))
    scale2 = params["bn2_g"] * lax.rsqrt(var2 + EPS)
    ss2 = jnp.stack([scale2, params["bn2_b"] - mean2 * scale2])      # (2, planes)

    w2 = _pack_w3x3(params["conv2_w"])
    out = fused_conv(out1, ss2, w2, 1, cout=planes, residual=shortcut)[0]

    return jnp.transpose(out, (0, 3, 1, 2))                          # NHWC -> NCHW


# ----------------------------- pure-JAX reference ----------------------------

def _ref_bn_relu(v, g, b):
    mean = v.mean(axis=(0, 1, 2), keepdims=True)
    var = v.var(axis=(0, 1, 2), keepdims=True)
    return jnp.maximum((v - mean) / jnp.sqrt(var + EPS) * g + b, 0.0)


def ref_forward(x_nchw, params, stride=1):
    x = jnp.transpose(x_nchw, (0, 2, 3, 1)).astype(jnp.float32)
    dn = ("NHWC", "HWIO", "NHWC")
    out = _ref_bn_relu(x, params["bn1_g"], params["bn1_b"])
    if "shortcut_w" in params:
        w_sc = jnp.transpose(params["shortcut_w"], (2, 3, 1, 0))
        shortcut = lax.conv_general_dilated(out, w_sc, (stride, stride), "VALID",
                                            dimension_numbers=dn)
    else:
        shortcut = x
    w1 = jnp.transpose(params["conv1_w"], (2, 3, 1, 0))
    out = lax.conv_general_dilated(out, w1, (stride, stride), ((1, 1), (1, 1)),
                                   dimension_numbers=dn)
    out = _ref_bn_relu(out, params["bn2_g"], params["bn2_b"])
    w2 = jnp.transpose(params["conv2_w"], (2, 3, 1, 0))
    out = lax.conv_general_dilated(out, w2, (1, 1), ((1, 1), (1, 1)),
                                   dimension_numbers=dn)
    out = out + shortcut
    return jnp.transpose(out, (0, 3, 1, 2))


# ----------------------------- main ------------------------------------------

if __name__ == "__main__":
    key = jax.random.PRNGKey(0)
    kx, kp1, kp2 = jax.random.split(key, 3)
    x = jax.random.normal(kx, (2, 4, 16, 16), jnp.float32)   # NCHW, like PyTorch

    # Tolerance covers bf16 MXU operand rounding (reference runs the convs in f32).
    RTOL = ATOL = 4e-2

    # Config A: stride=1, in_planes == planes -> identity shortcut.
    pA = init_params(kp1, in_planes=4, planes=4, stride=1)
    yA = jax.block_until_ready(preact_block_forward(x, pA, stride=1))
    rA = ref_forward(x, pA, stride=1)
    np.testing.assert_allclose(np.asarray(yA), np.asarray(rA), rtol=RTOL, atol=ATOL)
    assert yA.shape == (2, 4, 16, 16)

    # Config B: stride=2, planes=8 -> folded 1x1 conv shortcut + direct strided conv.
    pB = init_params(kp2, in_planes=4, planes=8, stride=2)
    yB = jax.block_until_ready(preact_block_forward(x, pB, stride=2))
    rB = ref_forward(x, pB, stride=2)
    np.testing.assert_allclose(np.asarray(yB), np.asarray(rB), rtol=RTOL, atol=ATOL)
    assert yB.shape == (2, 8, 8, 8)

    print("KERNEL_OK")
</pallas_src>

<mosaic_0001>
module attributes {stable_mosaic.version = 11 : i64} {
  func.func @_stats_kernel(%arg0: i32, %arg1: memref<32x16x4xf32, #tpu.memory_space<vmem>>, %arg2: memref<1x2x4xf32, #tpu.memory_space<vmem>>) attributes {dimension_semantics = [#tpu.dimension_semantics<parallel>], iteration_bounds = array<i64: 1>, scalar_prefetch = 0 : i64, scratch_operands = 0 : i64, tpu.core_type = #tpu.core_type<tc>, window_params = [{transform_indices = @transform_0, window_bounds = array<i64: 32, 16, 4>}, {transform_indices = @transform_1, window_bounds = array<i64: 1, 2, 4>}]} {
    %c0 = arith.constant 0 : index
    %c0_0 = arith.constant 0 : index
    %c0_1 = arith.constant 0 : index
    %0 = vector.load %arg1[%c0, %c0_0, %c0_1] : memref<32x16x4xf32, #tpu.memory_space<vmem>>, vector<32x16x4xf32>
    %1 = vector.shape_cast %0 : vector<32x16x4xf32> to vector<512x4xf32>
    %cst = arith.constant dense<0.000000e+00> : vector<4xf32>
    %2 = vector.multi_reduction <add>, %1, %cst [0] : vector<512x4xf32> to vector<4xf32>
    %3 = vector.shape_cast %2 : vector<4xf32> to vector<1x4xf32>
    %cst_2 = arith.constant 5.120000e+02 : f32
    %4 = vector.broadcast %cst_2 : f32 to vector<1x4xf32>
    %5 = arith.divf %3, %4 : vector<1x4xf32>
    %6 = vector.broadcast %5 : vector<1x4xf32> to vector<512x4xf32>
    %7 = arith.subf %1, %6 : vector<512x4xf32>
    %8 = arith.mulf %7, %7 : vector<512x4xf32>
    %cst_3 = arith.constant dense<0.000000e+00> : vector<4xf32>
    %9 = vector.multi_reduction <add>, %8, %cst_3 [0] : vector<512x4xf32> to vector<4xf32>
    %10 = vector.shape_cast %9 : vector<4xf32> to vector<1x4xf32>
    %c0_4 = arith.constant 0 : index
    %c0_5 = arith.constant 0 : index
    %c0_6 = arith.constant 0 : index
    %11 = vector.load %arg2[%c0_4, %c0_5, %c0_6] : memref<1x2x4xf32, #tpu.memory_space<vmem>>, vector<1x1x4xf32>
    %12 = vector.shape_cast %11 : vector<1x1x4xf32> to vector<1x4xf32>
    %13 = vector.shape_cast %5 : vector<1x4xf32> to vector<1x1x4xf32>
    tpu.vector_store %arg2[%c0_4, %c0_5, %c0_6], %13 {strides = array<i32>} : memref<1x2x4xf32, #tpu.memory_space<vmem>>, vector<1x1x4xf32>,
    %c0_7 = arith.constant 0 : index
    %c1 = arith.constant 1 : index
    %c0_8 = arith.constant 0 : index
    %14 = vector.load %arg2[%c0_7, %c1, %c0_8] : memref<1x2x4xf32, #tpu.memory_space<vmem>>, vector<1x1x4xf32>
    %15 = vector.shape_cast %14 : vector<1x1x4xf32> to vector<1x4xf32>
    %16 = vector.shape_cast %10 : vector<1x4xf32> to vector<1x1x4xf32>
    tpu.vector_store %arg2[%c0_7, %c1, %c0_8], %16 {strides = array<i32>} : memref<1x2x4xf32, #tpu.memory_space<vmem>>, vector<1x1x4xf32>,
    return
  }
  func.func @transform_0(%arg0: i32) -> (i32, i32, i32) {
    %c0_i32 = arith.constant 0 : i32
    %c0_i32_0 = arith.constant 0 : i32
    %c0_i32_1 = arith.constant 0 : i32
    return %arg0, %c0_i32, %c0_i32_0 : i32, i32, i32
  }
  func.func @transform_1(%arg0: i32) -> (i32, i32, i32) {
    %c0_i32 = arith.constant 0 : i32
    %c0_i32_0 = arith.constant 0 : i32
    %c0_i32_1 = arith.constant 0 : i32
    return %arg0, %c0_i32, %c0_i32_0 : i32, i32, i32
  }
}

</mosaic_0001>

<llo_original>
// kernel: tpu_custom_call.1
$region0: #{tpu_custom_call.1}
  #allocation0 [shape = 'u32[]', space=smem, size = 0x4, offset = 0x4, fixed_abs, tag = 'smem constant byte address 0x4 - core index']
  #allocation1 [shape = 'u32[144,128]{1,0:T(1,128)}', space=vmem, size = 0x12000, scoped, tag = 'internal scratch']
  %s0 = inlined_call_operand.vmem [shape: f32[32,16,4], index: 0, kind: input, shape index: {}]
  %s1 = inlined_call_operand.hbm [shape: f32[1,2,4], index: 1, kind: output, shape index: {}]
  %s2 = sld [smem:[#allocation0]]
  $region14: #{tpu_custom_call.1} parent=0
    _
  %s4 = ssub.s32 1, %s2
  %s5 = scalar_select 0, %s4, %s2
  $region1: #{tpu_custom_call.1} parent=0
    #allocation2 [shape = 'u8[1024]{0}', space=vmem, size = 0x400, scoped, tag = 'output window, operand 0, single buffered']
    #allocation3 [shape = 's32[1]{0}', space=sflag, size = 0x4, scoped, tag = 'scoped memory for tpu_custom_call.1']
    %6 = vsyncpa [#allocation3], 0
    // Predicated region
    $region2: #{tpu_custom_call.1} parent=1 // pred_check
      _
    $region3: #{tpu_custom_call.1} parent=1 // pred_check_branch
      %8 = sbr.rel (0) target = $region5
    $region4: #{tpu_custom_call.1} parent=1 // pred_region
      _
    $region5: #{tpu_custom_call.1} parent=1 // pred_fallthru
      _
    %v9 = vld [vmem:[%s0] sm:$0xff]
    %v10 = vld [vmem:[%s0 + $0x8] sm:$0xff]
    %v11 = vld [vmem:[%s0 + $0x10] sm:$0xff]
    %v12 = vld [vmem:[%s0 + $0x18] sm:$0xff]
    %v13 = vld [vmem:[%s0 + $0x20] sm:$0xff]
    %v14 = vld [vmem:[%s0 + $0x28] sm:$0xff]
    %v15 = vld [vmem:[%s0 + $0x30] sm:$0xff]
    %v16 = vld [vmem:[%s0 + $0x38] sm:$0xff]
    %v17 = vld [vmem:[%s0 + $0x40] sm:$0xff]
    %v18 = vld [vmem:[%s0 + $0x48] sm:$0xff]
    %v19 = vld [vmem:[%s0 + $0x50] sm:$0xff]
    %v20 = vld [vmem:[%s0 + $0x58] sm:$0xff]
    %v21 = vld [vmem:[%s0 + $0x60] sm:$0xff]
    %v22 = vld [vmem:[%s0 + $0x68] sm:$0xff]
    %v23 = vld [vmem:[%s0 + $0x70] sm:$0xff]
    %v24 = vld [vmem:[%s0 + $0x78] sm:$0xff]
    %v25 = vld [vmem:[%s0 + $0x80] sm:$0xff]
    %v26 = vld [vmem:[%s0 + $0x88] sm:$0xff]
    %v27 = vld [vmem:[%s0 + $0x90] sm:$0xff]
    %v28 = vld [vmem:[%s0 + $0x98] sm:$0xff]
    %v29 = vld [vmem:[%s0 + $0xa0] sm:$0xff]
    %v30 = vld [vmem:[%s0 + $0xa8] sm:$0xff]
    %v31 = vld [vmem:[%s0 + $0xb0] sm:$0xff]
    %v32 = vld [vmem:[%s0 + $0xb8] sm:$0xff]
    %v33 = vld [vmem:[%s0 + $0xc0] sm:$0xff]
    %v34 = vld [vmem:[%s0 + $0xc8] sm:$0xff]
    %v35 = vld [vmem:[%s0 + $0xd0] sm:$0xff]
    %v36 = vld [vmem:[%s0 + $0xd8] sm:$0xff]
    %v37 = vld [vmem:[%s0 + $0xe0] sm:$0xff]
    %v38 = vld [vmem:[%s0 + $0xe8] sm:$0xff]
    %v39 = vld [vmem:[%s0 + $0xf0] sm:$0xff]
    %v40 = vld [vmem:[%s0 + $0xf8] sm:$0xff]
    %v41 = vld [vmem:[%s0 + $0x100] sm:$0xff]
    %v42 = vld [vmem:[%s0 + $0x108] sm:$0xff]
    %v43 = vld [vmem:[%s0 + $0x110] sm:$0xff]
    %v44 = vld [vmem:[%s0 + $0x118] sm:$0xff]
    %v45 = vld [vmem:[%s0 + $0x120] sm:$0xff]
    %v46 = vld [vmem:[%s0 + $0x128] sm:$0xff]
    %v47 = vld [vmem:[%s0 + $0x130] sm:$0xff]
    %v48 = vld [vmem:[%s0 + $0x138] sm:$0xff]
    %v49 = vld [vmem:[%s0 + $0x140] sm:$0xff]
    %v50 = vld [vmem:[%s0 + $0x148] sm:$0xff]
    %v51 = vld [vmem:[%s0 + $0x150] sm:$0xff]
    %v52 = vld [vmem:[%s0 + $0x158] sm:$0xff]
    %v53 = vld [vmem:[%s0 + $0x160] sm:$0xff]
    %v54 = vld [vmem:[%s0 + $0x168] sm:$0xff]
    %v55 = vld [vmem:[%s0 + $0x170] sm:$0xff]
    %v56 = vld [vmem:[%s0 + $0x178] sm:$0xff]
    %v57 = vld [vmem:[%s0 + $0x180] sm:$0xff]
    %v58 = vld [vmem:[%s0 + $0x188] sm:$0xff]
    %v59 = vld [vmem:[%s0 + $0x190] sm:$0xff]
    %v60 = vld [vmem:[%s0 + $0x198] sm:$0xff]
    %v61 = vld [vmem:[%s0 + $0x1a0] sm:$0xff]
    %v62 = vld [vmem:[%s0 + $0x1a8] sm:$0xff]
    %v63 = vld [vmem:[%s0 + $0x1b0] sm:$0xff]
    %v64 = vld [vmem:[%s0 + $0x1b8] sm:$0xff]
    %v65 = vld [vmem:[%s0 + $0x1c0] sm:$0xff]
    %v66 = vld [vmem:[%s0 + $0x1c8] sm:$0xff]
    %v67 = vld [vmem:[%s0 + $0x1d0] sm:$0xff]
    %v68 = vld [vmem:[%s0 + $0x1d8] sm:$0xff]
    %v69 = vld [vmem:[%s0 + $0x1e0] sm:$0xff]
    %v70 = vld [vmem:[%s0 + $0x1e8] sm:$0xff]
    %v71 = vld [vmem:[%s0 + $0x1f0] sm:$0xff]
    %v72 = vld [vmem:[%s0 + $0x1f8] sm:$0xff]
    %vm73 = vcmask 31744
    %v74 = vsel %vm73, %v9, 0.0
    %v75 = vsel %vm73, %v10, 0.0
    %v76 = vadd.f32 %v74, %v75
    %v77 = vsel %vm73, %v11, 0.0
    %v78 = vadd.f32 %v76, %v77
    %v79 = vsel %vm73, %v12, 0.0
    %v80 = vadd.f32 %v78, %v79
    %v81 = vsel %vm73, %v13, 0.0
    %v82 = vadd.f32 %v80, %v81
    %v83 = vsel %vm73, %v14, 0.0
    %v84 = vadd.f32 %v82, %v83
    %v85 = vsel %vm73, %v15, 0.0
    %v86 = vadd.f32 %v84, %v85
    %v87 = vsel %vm73, %v16, 0.0
    %v88 = vadd.f32 %v86, %v87
    %v89 = vsel %vm73, %v17, 0.0
    %v90 = vadd.f32 %v88, %v89
    %v91 = vsel %vm73, %v18, 0.0
    %v92 = vadd.f32 %v90, %v91
    %v93 = vsel %vm73, %v19, 0.0
    %v94 = vadd.f32 %v92, %v93
    %v95 = vsel %vm73, %v20, 0.0
    %v96 = vadd.f32 %v94, %v95
    %v97 = vsel %vm73, %v21, 0.0
    %v98 = vadd.f32 %v96, %v97
    %v99 = vsel %vm73, %v22, 0.0
    %v100 = vadd.f32 %v98, %v99
    %v101 = vsel %vm73, %v23, 0.0
    %v102 = vadd.f32 %v100, %v101
    %v103 = vsel %vm73, %v24, 0.0
    %v104 = vadd.f32 %v102, %v103
    %v105 = vsel %vm73, %v25, 0.0
    %v106 = vadd.f32 %v104, %v105
    %v107 = vsel %vm73, %v26, 0.0
    %v108 = vadd.f32 %v106, %v107
    %v109 = vsel %vm73, %v27, 0.0
    %v110 = vadd.f32 %v108, %v109
    %v111 = vsel %vm73, %v28, 0.0
    %v112 = vadd.f32 %v110, %v111
    %v113 = vsel %vm73, %v29, 0.0
    %v114 = vadd.f32 %v112, %v113
    %v115 = vsel %vm73, %v30, 0.0
    %v116 = vadd.f32 %v114, %v115
    %v117 = vsel %vm73, %v31, 0.0
    %v118 = vadd.f32 %v116, %v117
    %v119 = vsel %vm73, %v32, 0.0
    %v120 = vadd.f32 %v118, %v119
    %v121 = vsel %vm73, %v33, 0.0
    %v122 = vadd.f32 %v120, %v121
    %v123 = vsel %vm73, %v34, 0.0
    %v124 = vadd.f32 %v122, %v123
    %v125 = vsel %vm73, %v35, 0.0
    %v126 = vadd.f32 %v124, %v125
    %v127 = vsel %vm73, %v36, 0.0
    %v128 = vadd.f32 %v126, %v127
    %v129 = vsel %vm73, %v37, 0.0
    %v130 = vadd.f32 %v128, %v129
    %v131 = vsel %vm73, %v38, 0.0
    %v132 = vadd.f32 %v130, %v131
    %v133 = vsel %vm73, %v39, 0.0
    %v134 = vadd.f32 %v132, %v133
    %v135 = vsel %vm73, %v40, 0.0
    %v136 = vadd.f32 %v134, %v135
    %v137 = vsel %vm73, %v41, 0.0
    %v138 = vadd.f32 %v136, %v137
    %v139 = vsel %vm73, %v42, 0.0
    %v140 = vadd.f32 %v138, %v139
    %v141 = vsel %vm73, %v43, 0.0
    %v142 = vadd.f32 %v140, %v141
    %v143 = vsel %vm73, %v44, 0.0
    %v144 = vadd.f32 %v142, %v143
    %v145 = vsel %vm73, %v45, 0.0
    %v146 = vadd.f32 %v144, %v145
    %v147 = vsel %vm73, %v46, 0.0
    %v148 = vadd.f32 %v146, %v147
    %v149 = vsel %vm73, %v47, 0.0
    %v150 = vadd.f32 %v148, %v149
    %v151 = vsel %vm73, %v48, 0.0
    %v152 = vadd.f32 %v150, %v151
    %v153 = vsel %vm73, %v49, 0.0
    %v154 = vadd.f32 %v152, %v153
    %v155 = vsel %vm73, %v50, 0.0
    %v156 = vadd.f32 %v154, %v155
    %v157 = vsel %vm73, %v51, 0.0
    %v158 = vadd.f32 %v156, %v157
    %v159 = vsel %vm73, %v52, 0.0
    %v160 = vadd.f32 %v158, %v159
    %v161 = vsel %vm73, %v53, 0.0
    %v162 = vadd.f32 %v160, %v161
    %v163 = vsel %vm73, %v54, 0.0
    %v164 = vadd.f32 %v162, %v163
    %v165 = vsel %vm73, %v55, 0.0
    %v166 = vadd.f32 %v164, %v165
    %v167 = vsel %vm73, %v56, 0.0
    %v168 = vadd.f32 %v166, %v167
    %v169 = vsel %vm73, %v57, 0.0
    %v170 = vadd.f32 %v168, %v169
    %v171 = vsel %vm73, %v58, 0.0
    %v172 = vadd.f32 %v170, %v171
    %v173 = vsel %vm73, %v59, 0.0
    %v174 = vadd.f32 %v172, %v173
    %v175 = vsel %vm73, %v60, 0.0
    %v176 = vadd.f32 %v174, %v175
    %v177 = vsel %vm73, %v61, 0.0
    %v178 = vadd.f32 %v176, %v177
    %v179 = vsel %vm73, %v62, 0.0
    %v180 = vadd.f32 %v178, %v179
    %v181 = vsel %vm73, %v63, 0.0
    %v182 = vadd.f32 %v180, %v181
    %v183 = vsel %vm73, %v64, 0.0
    %v184 = vadd.f32 %v182, %v183
    %v185 = vsel %vm73, %v65, 0.0
    %v186 = vadd.f32 %v184, %v185
    %v187 = vsel %vm73, %v66, 0.0
    %v188 = vadd.f32 %v186, %v187
    %v189 = vsel %vm73, %v67, 0.0
    %v190 = vadd.f32 %v188, %v189
    %v191 = vsel %vm73, %v68, 0.0
    %v192 = vadd.f32 %v190, %v191
    %v193 = vsel %vm73, %v69, 0.0
    %v194 = vadd.f32 %v192, %v193
    %v195 = vsel %vm73, %v70, 0.0
    %v196 = vadd.f32 %v194, %v195
    %v197 = vsel %vm73, %v71, 0.0
    %v198 = vadd.f32 %v196, %v197
    %v199 = vsel %vm73, %v72, 0.0
    %v200 = vadd.f32 %v198, %v199
    %v201 = vrot.slane %v200, 4
    %v202 = vadd.f32 %v200, %v201
    %v203 = vrot.slane %v202, 2
    %v204 = vadd.f32 %v202, %v203
    %v205 = vrot.slane %v204, 1
    %v206 = vadd.f32 %v204, %v205
    %v207 = vrcp.pop 512.0
    %v208 = vmul.f32 %v206, %v207
    %v209 = vsub.f32 %v9, %v208
    %v210 = vsub.f32 %v10, %v208
    %v211 = vsub.f32 %v11, %v208
    %v212 = vsub.f32 %v12, %v208
    %v213 = vsub.f32 %v13, %v208
    %v214 = vsub.f32 %v14, %v208
    %v215 = vsub.f32 %v15, %v208
    %v216 = vsub.f32 %v16, %v208
    %v217 = vsub.f32 %v17, %v208
    %v218 = vsub.f32 %v18, %v208
    %v219 = vsub.f32 %v19, %v208
    %v220 = vsub.f32 %v20, %v208
    %v221 = vsub.f32 %v21, %v208
    %v222 = vsub.f32 %v22, %v208
    %v223 = vsub.f32 %v23, %v208
    %v224 = vsub.f32 %v24, %v208
    %v225 = vsub.f32 %v25, %v208
    %v226 = vsub.f32 %v26, %v208
    %v227 = vsub.f32 %v27, %v208
    %v228 = vsub.f32 %v28, %v208
    %v229 = vsub.f32 %v29, %v208
    %v230 = vsub.f32 %v30, %v208
    %v231 = vsub.f32 %v31, %v208
    %v232 = vsub.f32 %v32, %v208
    %v233 = vsub.f32 %v33, %v208
    %v234 = vsub.f32 %v34, %v208
    %v235 = vsub.f32 %v35, %v208
    %v236 = vsub.f32 %v36, %v208
    %v237 = vsub.f32 %v37, %v208
    %v238 = vsub.f32 %v38, %v208
    %v239 = vsub.f32 %v39, %v208
    %v240 = vsub.f32 %v40, %v208
    %v241 = vsub.f32 %v41, %v208
    %v242 = vsub.f32 %v42, %v208
    %v243 = vsub.f32 %v43, %v208
    %v244 = vsub.f32 %v44, %v208
    %v245 = vsub.f32 %v45, %v208
    %v246 = vsub.f32 %v46, %v208
    %v247 = vsub.f32 %v47, %v208
    %v248 = vsub.f32 %v48, %v208
    %v249 = vsub.f32 %v49, %v208
    %v250 = vsub.f32 %v50, %v208
    %v251 = vsub.f32 %v51, %v208
    %v252 = vsub.f32 %v52, %v208
    %v253 = vsub.f32 %v53, %v208
    %v254 = vsub.f32 %v54, %v208
    %v255 = vsub.f32 %v55, %v208
    %v256 = vsub.f32 %v56, %v208
    %v257 = vsub.f32 %v57, %v208
    %v258 = vsub.f32 %v58, %v208
    %v259 = vsub.f32 %v59, %v208
    %v260 = vsub.f32 %v60, %v208
    %v261 = vsub.f32 %v61, %v208
    %v262 = vsub.f32 %v62, %v208
    %v263 = vsub.f32 %v63, %v208
    %v264 = vsub.f32 %v64, %v208
    %v265 = vsub.f32 %v65, %v208
    %v266 = vsub.f32 %v66, %v208
    %v267 = vsub.f32 %v67, %v208
    %v268 = vsub.f32 %v68, %v208
    %v269 = vsub.f32 %v69, %v208
    %v270 = vsub.f32 %v70, %v208
    %v271 = vsub.f32 %v71, %v208
    %v272 = vsub.f32 %v72, %v208
    %v273 = vmul.f32 %v209, %v209
    %v274 = vmul.f32 %v210, %v210
    %v275 = vmul.f32 %v211, %v211
    %v276 = vmul.f32 %v212, %v212
    %v277 = vmul.f32 %v213, %v213
    %v278 = vmul.f32 %v214, %v214
    %v279 = vmul.f32 %v215, %v215
    %v280 = vmul.f32 %v216, %v216
    %v281 = vmul.f32 %v217, %v217
    %v282 = vmul.f32 %v218, %v218
    %v283 = vmul.f32 %v219, %v219
    %v284 = vmul.f32 %v220, %v220
    %v285 = vmul.f32 %v221, %v221
    %v286 = vmul.f32 %v222, %v222
    %v287 = vmul.f32 %v223, %v223
    %v288 = vmul.f32 %v224, %v224
    %v289 = vmul.f32 %v225, %v225
    %v290 = vmul.f32 %v226, %v226
    %v291 = vmul.f32 %v227, %v227
    %v292 = vmul.f32 %v228, %v228
    %v293 = vmul.f32 %v229, %v229
    %v294 = vmul.f32 %v230, %v230
    %v295 = vmul.f32 %v231, %v231
    %v296 = vmul.f32 %v232, %v232
    %v297 = vmul.f32 %v233, %v233
    %v298 = vmul.f32 %v234, %v234
    %v299 = vmul.f32 %v235, %v235
    %v300 = vmul.f32 %v236, %v236
    %v301 = vmul.f32 %v237, %v237
    %v302 = vmul.f32 %v238, %v238
    %v303 = vmul.f32 %v239, %v239
    %v304 = vmul.f32 %v240, %v240
    %v305 = vmul.f32 %v241, %v241
    %v306 = vmul.f32 %v242, %v242
    %v307 = vmul.f32 %v243, %v243
    %v308 = vmul.f32 %v244, %v244
    %v309 = vmul.f32 %v245, %v245
    %v310 = vmul.f32 %v246, %v246
    %v311 = vmul.f32 %v247, %v247
    %v312 = vmul.f32 %v248, %v248
    %v313 = vmul.f32 %v249, %v249
    %v314 = vmul.f32 %v250, %v250
    %v315 = vmul.f32 %v251, %v251
    %v316 = vmul.f32 %v252, %v252
    %v317 = vmul.f32 %v253, %v253
    %v318 = vmul.f32 %v254, %v254
    %v319 = vmul.f32 %v255, %v255
    %v320 = vmul.f32 %v256, %v256
    %v321 = vmul.f32 %v257, %v257
    %v322 = vmul.f32 %v258, %v258
    %v323 = vmul.f32 %v259, %v259
    %v324 = vmul.f32 %v260, %v260
    %v325 = vmul.f32 %v261, %v261
    %v326 = vmul.f32 %v262, %v262
    %v327 = vmul.f32 %v263, %v263
    %v328 = vmul.f32 %v264, %v264
    %v329 = vmul.f32 %v265, %v265
    %v330 = vmul.f32 %v266, %v266
    %v331 = vmul.f32 %v267, %v267
    %v332 = vmul.f32 %v268, %v268
    %v333 = vmul.f32 %v269, %v269
    %v334 = vmul.f32 %v270, %v270
    %v335 = vmul.f32 %v271, %v271
    %v336 = vmul.f32 %v272, %v272
    %v337 = vsel %vm73, %v273, 0.0
    %v338 = vsel %vm73, %v274, 0.0
    %v339 = vadd.f32 %v337, %v338
    %v340 = vsel %vm73, %v275, 0.0
    %v341 = vadd.f32 %v339, %v340
    %v342 = vsel %vm73, %v276, 0.0
    %v343 = vadd.f32 %v341, %v342
    %v344 = vsel %vm73, %v277, 0.0
    %v345 = vadd.f32 %v343, %v344
    %v346 = vsel %vm73, %v278, 0.0
    %v347 = vadd.f32 %v345, %v346
    %v348 = vsel %vm73, %v279, 0.0
    %v349 = vadd.f32 %v347, %v348
    %v350 = vsel %vm73, %v280, 0.0
    %v351 = vadd.f32 %v349, %v350
    %v352 = vsel %vm73, %v281, 0.0
    %v353 = vadd.f32 %v351, %v352
    %v354 = vsel %vm73, %v282, 0.0
    %v355 = vadd.f32 %v353, %v354
    %v356 = vsel %vm73, %v283, 0.0
    %v357 = vadd.f32 %v355, %v356
    %v358 = vsel %vm73, %v284, 0.0
    %v359 = vadd.f32 %v357, %v358
    %v360 = vsel %vm73, %v285, 0.0
    %v361 = vadd.f32 %v359, %v360
    %v362 = vsel %vm73, %v286, 0.0
    %v363 = vadd.f32 %v361, %v362
    %v364 = vsel %vm73, %v287, 0.0
    %v365 = vadd.f32 %v363, %v364
    %v366 = vsel %vm73, %v288, 0.0
    %v367 = vadd.f32 %v365, %v366
    %v368 = vsel %vm73, %v289, 0.0
    %v369 = vadd.f32 %v367, %v368
    %v370 = vsel %vm73, %v290, 0.0
    %v371 = vadd.f32 %v369, %v370
    %v372 = vsel %vm73, %v291, 0.0
    %v373 = vadd.f32 %v371, %v372
    %v374 = vsel %vm73, %v292, 0.0
    %v375 = vadd.f32 %v373, %v374
    %v376 = vsel %vm73, %v293, 0.0
    %v377 = vadd.f32 %v375, %v376
    %v378 = vsel %vm73, %v294, 0.0
    %v379 = vadd.f32 %v377, %v378
    %v380 = vsel %vm73, %v295, 0.0
    %v381 = vadd.f32 %v379, %v380
    %v382 = vsel %vm73, %v296, 0.0
    %v383 = vadd.f32 %v381, %v382
    %v384 = vsel %vm73, %v297, 0.0
    %v385 = vadd.f32 %v383, %v384
    %v386 = vsel %vm73, %v298, 0.0
    %v387 = vadd.f32 %v385, %v386
    %v388 = vsel %vm73, %v299, 0.0
    %v389 = vadd.f32 %v387, %v388
    %v390 = vsel %vm73, %v300, 0.0
    %v391 = vadd.f32 %v389, %v390
    %v392 = vsel %vm73, %v301, 0.0
    %v393 = vadd.f32 %v391, %v392
    %v394 = vsel %vm73, %v302, 0.0
    %v395 = vadd.f32 %v393, %v394
    %v396 = vsel %vm73, %v303, 0.0
    %v397 = vadd.f32 %v395, %v396
    %v398 = vsel %vm73, %v304, 0.0
    %v399 = vadd.f32 %v397, %v398
    %v400 = vsel %vm73, %v305, 0.0
    %v401 = vadd.f32 %v399, %v400
    %v402 = vsel %vm73, %v306, 0.0
    %v403 = vadd.f32 %v401, %v402
    %v404 = vsel %vm73, %v307, 0.0
    %v405 = vadd.f32 %v403, %v404
    %v406 = vsel %vm73, %v308, 0.0
    %v407 = vadd.f32 %v405, %v406
    %v408 = vsel %vm73, %v309, 0.0
    %v409 = vadd.f32 %v407, %v408
    %v410 = vsel %vm73, %v310, 0.0
    %v411 = vadd.f32 %v409, %v410
    %v412 = vsel %vm73, %v311, 0.0
    %v413 = vadd.f32 %v411, %v412
    %v414 = vsel %vm73, %v312, 0.0
    %v415 = vadd.f32 %v413, %v414
    %v416 = vsel %vm73, %v313, 0.0
    %v417 = vadd.f32 %v415, %v416
    %v418 = vsel %vm73, %v314, 0.0
    %v419 = vadd.f32 %v417, %v418
    %v420 = vsel %vm73, %v315, 0.0
    %v421 = vadd.f32 %v419, %v420
    %v422 = vsel %vm73, %v316, 0.0
    %v423 = vadd.f32 %v421, %v422
    %v424 = vsel %vm73, %v317, 0.0
    %v425 = vadd.f32 %v423, %v424
    %v426 = vsel %vm73, %v318, 0.0
    %v427 = vadd.f32 %v425, %v426
    %v428 = vsel %vm73, %v319, 0.0
    %v429 = vadd.f32 %v427, %v428
    %v430 = vsel %vm73, %v320, 0.0
    %v431 = vadd.f32 %v429, %v430
    %v432 = vsel %vm73, %v321, 0.0
    %v433 = vadd.f32 %v431, %v432
    %v434 = vsel %vm73, %v322, 0.0
    %v435 = vadd.f32 %v433, %v434
    %v436 = vsel %vm73, %v323, 0.0
    %v437 = vadd.f32 %v435, %v436
    %v438 = vsel %vm73, %v324, 0.0
    %v439 = vadd.f32 %v437, %v438
    %v440 = vsel %vm73, %v325, 0.0
    %v441 = vadd.f32 %v439, %v440
    %v442 = vsel %vm73, %v326, 0.0
    %v443 = vadd.f32 %v441, %v442
    %v444 = vsel %vm73, %v327, 0.0
    %v445 = vadd.f32 %v443, %v444
    %v446 = vsel %vm73, %v328, 0.0
    %v447 = vadd.f32 %v445, %v446
    %v448 = vsel %vm73, %v329, 0.0
    %v449 = vadd.f32 %v447, %v448
    %v450 = vsel %vm73, %v330, 0.0
    %v451 = vadd.f32 %v449, %v450
    %v452 = vsel %vm73, %v331, 0.0
    %v453 = vadd.f32 %v451, %v452
    %v454 = vsel %vm73, %v332, 0.0
    %v455 = vadd.f32 %v453, %v454
    %v456 = vsel %vm73, %v333, 0.0
    %v457 = vadd.f32 %v455, %v456
    %v458 = vsel %vm73, %v334, 0.0
    %v459 = vadd.f32 %v457, %v458
    %v460 = vsel %vm73, %v335, 0.0
    %v461 = vadd.f32 %v459, %v460
    %v462 = vsel %vm73, %v336, 0.0
    %v463 = vadd.f32 %v461, %v462
    %v464 = vrot.slane %v463, 4
    %v465 = vadd.f32 %v463, %v464
    %v466 = vrot.slane %v465, 2
    %v467 = vadd.f32 %v465, %v466
    %v468 = vrot.slane %v467, 1
    %v469 = vadd.f32 %v467, %v468
    %vm470 = vcmask 24576
    %471 = vst.msk [vmem:[#allocation2] sm:$0x1] %vm470, %v208
    %472 = vst.msk [vmem:[#allocation2 + $0x1] sm:$0x1] %vm470, %v469
    // Predicated region
    $region6: #{tpu_custom_call.1} parent=1 // pred_check
      _
    $region7: #{tpu_custom_call.1} parent=1 // pred_check_branch
      %474 = sbr.rel (0) target = $region9
    $region8: #{tpu_custom_call.1} parent=1 // pred_region
      %s476 = ssub.s32 32, 32
      %477 = vsyncadd [#allocation3], %s476
      %s479 = sshll.u32 [#allocation2], 4
      %s480 = int_to_ptr.vmem [resolvable:$true] %s479
      %482 = dma.vmem_to_hbm [thread:$0]  %s480, 32, %s1, [#allocation3]
    $region9: #{tpu_custom_call.1} parent=1 // pred_fallthru
      _
    // Predicated region
    $region10: #{tpu_custom_call.1} parent=1 // pred_check
      _
    $region11: #{tpu_custom_call.1} parent=1 // pred_check_branch
      %484 = sbr.rel (0) target = $region13
    $region12: #{tpu_custom_call.1} parent=1 // pred_region
      %485 = dma.done [#allocation3], 32
    $region13: #{tpu_custom_call.1} parent=1 // pred_fallthru
      _
    %486 = vsyncpa [#allocation3], 1

</llo_original>
